<compile_context>
chip_gen: v5e
topology: v5e:2x2
jax: 0.10.0
libtpu: 0.0.40
codegen_flags: <defaults>
</compile_context>

<pallas_src>
import jax
import jax.numpy as jnp
from jax import lax
from jax.experimental import pallas as pl
from jax.experimental.pallas import tpu as pltpu

_LANES = 128
_SUB_ROWS = 1024                    # rows per in-kernel reduction step
_SMALL_INPUT_BYTES = 256 * 1024     # below this, plain XLA beats pallas_call
_VMEM_LIMIT_BYTES = 32 * 1024 * 1024


def _cdiv(a, b):
    return (a + b - 1) // b


def _round_up(x, m):
    return ((x + m - 1) // m) * m


def _device_kind():
    try:
        d = jax.devices()[0]
        if d.platform != "tpu":
            return ""
        return d.device_kind.lower()
    except Exception:
        return ""


def _tile_bytes_target(kind):
    # v5e has the smallest default scoped VMEM -> 4 MiB tiles (8 MiB
    # double-buffered); v6e / v7x get 8 MiB tiles (16 MiB double-buffered).
    if "v5 lite" in kind or "v5e" in kind or "v5lite" in kind:
        return 4 << 20
    return 8 << 20


def _num_tc_splits(kind):
    # 2 TensorCores per chip on v4 (megacore) and v7x; 1 on v5e / v6e / v5p.
    # TODO(synk): on v7x verify "parallel" really shards this axis across both
    # TensorCores in this toolchain; if not, switch that axis to
    # pltpu.CORE_PARALLEL (kept as plain "parallel" here for portability).
    if "v4" in kind or "v7" in kind or "7x" in kind:
        return 2
    return 1


def _make_sum_sqrt_kernel(*, rows_valid, tile_rows, tiles_per_split, needs_mask):
    """Build the reduction kernel with trace-time constants closed over."""
    if tile_rows <= _SUB_ROWS:
        sub_rows, n_sub = tile_rows, 1
    else:
        assert tile_rows % _SUB_ROWS == 0
        sub_rows, n_sub = _SUB_ROWS, tile_rows // _SUB_ROWS
    chunks = sub_rows // 8

    def _accum_fast(x_ref, acc_ref, local_off):
        sub = x_ref[pl.ds(local_off, sub_rows), :].astype(jnp.float32)
        part = jnp.sqrt(sub).reshape(chunks, 8, _LANES)
        acc_ref[...] += jnp.sum(part, axis=0)

    def _accum_masked(x_ref, acc_ref, local_off, tile_row_start):
        sub = x_ref[pl.ds(local_off, sub_rows), :].astype(jnp.float32)
        rid = (tile_row_start + local_off
               + lax.broadcasted_iota(jnp.int32, (sub_rows, _LANES), 0))
        # Mask BEFORE sqrt: out-of-bounds rows of an edge block hold
        # unspecified data and must not inject NaN/Inf.
        sub = jnp.where(rid < rows_valid, sub, 0.0)
        part = jnp.sqrt(sub).reshape(chunks, 8, _LANES)
        acc_ref[...] += jnp.sum(part, axis=0)

    def _tile_loop(fn):
        if n_sub == 1:
            fn(0)
        else:
            def body(j, carry):
                fn(pl.multiple_of(j * sub_rows, sub_rows))
                return carry
            lax.fori_loop(0, n_sub, body, 0)

    def kernel(x_ref, acc_ref):
        i = pl.program_id(1)   # streaming reduction axis ("arbitrary")

        # Zero this split's (8,128) accumulator on its first step.
        @pl.when(i == 0)
        def _():
            acc_ref[...] = jnp.zeros_like(acc_ref)

        if not needs_mask:
            # Every tile is fully interior: no iota / compare / select at all.
            _tile_loop(lambda off: _accum_fast(x_ref, acc_ref, off))
        else:
            c = pl.program_id(0)   # TensorCore-split axis ("parallel")
            # Global row offset from the *unclamped* tile id, so a fully
            # out-of-range overhang tile masks to zero.
            tile_row_start = (c * tiles_per_split + i) * tile_rows
            interior = tile_row_start + tile_rows <= rows_valid

            @pl.when(interior)
            def _():
                _tile_loop(lambda off: _accum_fast(x_ref, acc_ref, off))

            @pl.when(jnp.logical_not(interior))
            def _():
                _tile_loop(lambda off: _accum_masked(
                    x_ref, acc_ref, off, tile_row_start))

    return kernel


def sum_sqrt_pallas(x):
    """sum(sqrt(x)) over all elements, computed with a Pallas TPU kernel."""
    flat = jnp.ravel(x)                       # keep input dtype; cast in-kernel
    n = flat.shape[0]
    itemsize = flat.dtype.itemsize

    # <128-element tail handled in plain JAX (avoids a full-array pad copy).
    rows = n // _LANES
    tail = flat[rows * _LANES:]
    tail_sum = (jnp.sum(jnp.sqrt(tail.astype(jnp.float32)))
                if tail.shape[0] else jnp.float32(0.0))
    if rows == 0:
        return tail_sum

    slab = flat[: rows * _LANES].reshape(rows, _LANES)

    kind = _device_kind()
    # Packed-sublane multiple for the *input* dtype (f32:8, bf16:16, int8:32).
    sublane_mult = max(8, 32 // max(itemsize, 1))
    target_rows = max(sublane_mult,
                      _tile_bytes_target(kind) // (_LANES * itemsize))

    tile_rows = min(target_rows, _round_up(rows, sublane_mult))
    if tile_rows > _SUB_ROWS:
        # Keep the in-kernel sub-chunk loop remainder-free.
        tile_rows = _round_up(tile_rows, _SUB_ROWS)

    n_tiles = _cdiv(rows, tile_rows)
    n_splits = _num_tc_splits(kind) if n_tiles >= 2 else 1
    tiles_per_split = _cdiv(n_tiles, n_splits)

    needs_mask = (rows % tile_rows != 0) or (n_splits * tiles_per_split != n_tiles)

    kernel = _make_sum_sqrt_kernel(
        rows_valid=rows, tile_rows=tile_rows,
        tiles_per_split=tiles_per_split, needs_mask=needs_mask)

    def in_index_map(c, i):
        # Clamp so the DMA stays in bounds for the (fully masked) overhang tile
        # that can appear when n_tiles does not divide evenly across splits.
        return (jnp.minimum(c * tiles_per_split + i, n_tiles - 1), 0)

    partials = pl.pallas_call(
        kernel,
        out_shape=jax.ShapeDtypeStruct((n_splits, 8, _LANES), jnp.float32),
        grid_spec=pltpu.PrefetchScalarGridSpec(
            num_scalar_prefetch=0,
            grid=(n_splits, tiles_per_split),
            in_specs=[pl.BlockSpec((tile_rows, _LANES), in_index_map)],
            # Squeezed leading dim -> kernel sees a clean (8,128) accumulator.
            out_specs=pl.BlockSpec((None, 8, _LANES), lambda c, i: (c, 0, 0)),
        ),
        compiler_params=pltpu.CompilerParams(
            dimension_semantics=("parallel", "arbitrary"),
            vmem_limit_bytes=_VMEM_LIMIT_BYTES,
        ),
    )(slab)

    # Single cross-lane/sublane collapse of the tiny (n_splits, 8, 128) partials.
    return jnp.sum(partials) + tail_sum


def test2_forward(inp, idx):
    # `idx` only feeds torch's checkpoint plumbing; the forward value ignores it.
    del idx
    nbytes = inp.size * inp.dtype.itemsize
    if nbytes < _SMALL_INPUT_BYTES:
        # pallas_call fixed launch overhead dominates tiny inputs; plain XLA wins.
        return jnp.sum(jnp.sqrt(inp.astype(jnp.float32)))
    return sum_sqrt_pallas(inp)


if __name__ == "__main__":
    key = jax.random.PRNGKey(0)
    # Nominal Test2 input: NCHW, non-negative so sqrt is well-defined
    # (matches torch, which would otherwise produce NaN).
    inp = jax.random.uniform(key, (2, 4, 16, 16), dtype=jnp.float32)
    idx = jnp.int32(3)

    out = jax.block_until_ready(test2_forward(inp, idx))
    ref = jnp.sum(jnp.sqrt(inp))
    assert jnp.allclose(out, ref, rtol=1e-5, atol=1e-5), (out, ref)

    # Exercise the Pallas kernel directly on the nominal input (test2_forward
    # takes the small-input fallback for this 8 KiB tensor).
    out_k = jax.block_until_ready(sum_sqrt_pallas(inp))
    assert jnp.allclose(out_k, ref, rtol=1e-5, atol=1e-5), (out_k, ref)

    k1, k2, k3 = jax.random.split(key, 3)

    # Multi-tile streaming path: interior fast-path tiles + one masked boundary
    # tile (and, on 2-TC chips, the 2-way split).
    x1 = jax.random.uniform(k1, (8, 4, 256, 320), dtype=jnp.float32)
    out1 = jax.block_until_ready(sum_sqrt_pallas(x1))
    ref1 = jnp.sum(jnp.sqrt(x1))
    assert jnp.allclose(out1, ref1, rtol=1e-4, atol=1e-2), (out1, ref1)

    # Ragged element count (not a multiple of 128): plain-JAX tail + masked
    # single-tile Pallas prefix.
    x2 = jax.random.uniform(k2, (3, 5, 17, 13), dtype=jnp.float32)
    out2 = jax.block_until_ready(sum_sqrt_pallas(x2))
    ref2 = jnp.sum(jnp.sqrt(x2))
    assert jnp.allclose(out2, ref2, rtol=1e-4, atol=1e-3), (out2, ref2)

    # Narrow dtype: bf16 moves half the HBM bytes and is cast to f32 in-kernel;
    # tile rows rounded to the bf16 packed-sublane multiple.
    x3 = jax.random.uniform(k3, (2, 4, 128, 160), dtype=jnp.float32).astype(jnp.bfloat16)
    out3 = jax.block_until_ready(sum_sqrt_pallas(x3))
    ref3 = jnp.sum(jnp.sqrt(x3.astype(jnp.float32)))
    assert jnp.allclose(out3, ref3, rtol=1e-3, atol=1e-1), (out3, ref3)

    print("KERNEL_OK")
</pallas_src>

<mosaic_0001>
module attributes {stable_mosaic.version = 11 : i64} {
  func.func @kernel(%arg0: i32, %arg1: i32, %arg2: memref<16x128xf32, #tpu.memory_space<vmem>>, %arg3: memref<1x8x128xf32, #tpu.memory_space<vmem>>) attributes {dimension_semantics = [#tpu.dimension_semantics<parallel>, #tpu.dimension_semantics<arbitrary>], iteration_bounds = array<i64: 1, 1>, scalar_prefetch = 0 : i64, scratch_operands = 0 : i64, tpu.core_type = #tpu.core_type<tc>, window_params = [{transform_indices = @transform_0, window_bounds = array<i64: 16, 128>}, {transform_indices = @transform_1, window_bounds = array<i64: 1, 8, 128>}]} {
    %c0_i32 = arith.constant 0 : i32
    %0 = arith.cmpi eq, %arg1, %c0_i32 : i32
    %1 = arith.extui %0 : i1 to i32
    %c0_i32_0 = arith.constant 0 : i32
    %2 = arith.cmpi ne, %1, %c0_i32_0 : i32
    scf.if %2 {
      %cst_8 = arith.constant 0.000000e+00 : f32
      %13 = vector.broadcast %cst_8 : f32 to vector<8x128xf32>
      %c0_9 = arith.constant 0 : index
      %c0_10 = arith.constant 0 : index
      %c0_11 = arith.constant 0 : index
      %14 = vector.load %arg3[%c0_9, %c0_10, %c0_11] : memref<1x8x128xf32, #tpu.memory_space<vmem>>, vector<1x8x128xf32>
      %15 = vector.shape_cast %14 : vector<1x8x128xf32> to vector<8x128xf32>
      %16 = vector.shape_cast %13 : vector<8x128xf32> to vector<1x8x128xf32>
      tpu.vector_store %arg3[%c0_9, %c0_10, %c0_11], %16 {strides = array<i32>} : memref<1x8x128xf32, #tpu.memory_space<vmem>>, vector<1x8x128xf32>,
    } else {
    }
    %c0 = arith.constant 0 : index
    %c0_1 = arith.constant 0 : index
    %3 = vector.load %arg2[%c0, %c0_1] : memref<16x128xf32, #tpu.memory_space<vmem>>, vector<16x128xf32>
    %4 = math.sqrt %3 : vector<16x128xf32>
    %5 = vector.shape_cast %4 : vector<16x128xf32> to vector<2x8x128xf32>
    %c0_2 = arith.constant 0 : index
    %c0_3 = arith.constant 0 : index
    %c0_4 = arith.constant 0 : index
    %6 = vector.load %arg3[%c0_2, %c0_3, %c0_4] : memref<1x8x128xf32, #tpu.memory_space<vmem>>, vector<1x8x128xf32>
    %7 = vector.shape_cast %6 : vector<1x8x128xf32> to vector<8x128xf32>
    %cst = arith.constant dense<0.000000e+00> : vector<8x128xf32>
    %8 = vector.multi_reduction <add>, %5, %cst [0] : vector<2x8x128xf32> to vector<8x128xf32>
    %9 = arith.addf %7, %8 : vector<8x128xf32>
    %c0_5 = arith.constant 0 : index
    %c0_6 = arith.constant 0 : index
    %c0_7 = arith.constant 0 : index
    %10 = vector.load %arg3[%c0_5, %c0_6, %c0_7] : memref<1x8x128xf32, #tpu.memory_space<vmem>>, vector<1x8x128xf32>
    %11 = vector.shape_cast %10 : vector<1x8x128xf32> to vector<8x128xf32>
    %12 = vector.shape_cast %9 : vector<8x128xf32> to vector<1x8x128xf32>
    tpu.vector_store %arg3[%c0_5, %c0_6, %c0_7], %12 {strides = array<i32>} : memref<1x8x128xf32, #tpu.memory_space<vmem>>, vector<1x8x128xf32>,
    return
  }
  func.func @transform_0(%arg0: i32, %arg1: i32) -> (i32, i32) {
    %c1_i32 = arith.constant 1 : i32
    %0 = arith.muli %arg0, %c1_i32 : i32
    %1 = arith.addi %0, %arg1 : i32
    %c0_i32 = arith.constant 0 : i32
    %2 = arith.minsi %1, %c0_i32 : i32
    %c0_i32_0 = arith.constant 0 : i32
    %c0_i32_1 = arith.constant 0 : i32
    return %2, %c0_i32_0 : i32, i32
  }
  func.func @transform_1(%arg0: i32, %arg1: i32) -> (i32, i32, i32) {
    %c0_i32 = arith.constant 0 : i32
    %c0_i32_0 = arith.constant 0 : i32
    %c0_i32_1 = arith.constant 0 : i32
    return %arg0, %c0_i32, %c0_i32_0 : i32, i32, i32
  }
}

</mosaic_0001>

<llo_original>
// kernel: tpu_custom_call.1
$region0: #{tpu_custom_call.1}
  #allocation0 [shape = 'u32[]', space=smem, size = 0x4, offset = 0x4, fixed_abs, tag = 'smem constant byte address 0x4 - core index']
  #allocation1 [shape = 'u32[72,128]{1,0:T(1,128)}', space=vmem, size = 0x9000, scoped, tag = 'internal scratch']
  %s0 = inlined_call_operand.hbm [shape: f32[16,128], index: 0, kind: input, shape index: {}]
  %s1 = inlined_call_operand.hbm [shape: f32[1,8,128], index: 1, kind: output, shape index: {}]
  %s2 = sld [smem:[#allocation0]]
  $region22: #{tpu_custom_call.1} parent=0
    _
  %s4 = ssub.s32 1, %s2
  %s5 = scalar_select 0, %s4, %s2
  $region1: #{tpu_custom_call.1} parent=0
    #allocation2 [shape = 'u8[8192]{0}', space=vmem, size = 0x2000, scoped, tag = 'input window, operand 0, single buffered']
    #allocation3 [shape = 's32[1]{0}', space=sflag, size = 0x4, scoped, tag = 'scoped memory for tpu_custom_call.1']
    #allocation4 [shape = 's32[1]{0}', space=sflag, size = 0x4, scoped, tag = 'scoped memory for tpu_custom_call.1']
    #allocation5 [shape = 'u8[4096]{0}', space=vmem, size = 0x1000, scoped, tag = 'output window, operand 0, single buffered']
    %6 = vsyncpa [#allocation3], 0
    %7 = vsyncpa [#allocation4], 0
    // Predicated region
    $region2: #{tpu_custom_call.1} parent=1 // pred_check
      _
    $region3: #{tpu_custom_call.1} parent=1 // pred_check_branch
      %9 = sbr.rel (0) target = $region5
    $region4: #{tpu_custom_call.1} parent=1 // pred_region
      %s10 = sadd.s32 0, 0
      %p11 = scmp.lt.s32.totalorder %s10, 0
      %s12 = scalar_select %p11, %s10, 0
      %s13 = smul.u32 2, %s12
      %15 = vsyncadd [#allocation3], 0
      %s16 = smul.addr %s13, 8
      %s17 = scalar_lea.hbm %s0, %s16
      %s18 = sshll.u32 %s17, 4
      %s19 = int_to_ptr.hbm [resolvable:$true] %s18
      %s20 = sshll.u32 [#allocation2], 4
      %s21 = int_to_ptr.vmem [resolvable:$true] %s20
      %26 = dma.hbm_to_vmem [thread:$0]  %s19, 256, %s21, [#allocation3], 128, 128, 8
    $region5: #{tpu_custom_call.1} parent=1 // pred_fallthru
      _
    // Predicated region
    $region6: #{tpu_custom_call.1} parent=1 // pred_check
      _
    $region7: #{tpu_custom_call.1} parent=1 // pred_check_branch
      %28 = sbr.rel (0) target = $region9
    $region8: #{tpu_custom_call.1} parent=1 // pred_region
      %30 = dma.done [#allocation3], 256
    $region9: #{tpu_custom_call.1} parent=1 // pred_fallthru
      _
    %s31 = sadd.s32 0, 0
    %p32 = scmp.lt.s32.totalorder %s31, 0
    %s33 = scalar_select %p32, %s31, 0
    %s34 = smul.u32 2, %s33
    %p35 = scmp.eq.s32.totalorder 0, 0
    // Predicated region
    $region10: #{tpu_custom_call.1} parent=1 // pred_check
      %p36 = pneg %p35
    $region11: #{tpu_custom_call.1} parent=1 // pred_check_branch
      %38 = sbr.rel (%p36) target = $region13
    $region12: #{tpu_custom_call.1} parent=1 // pred_region
      %39 = vst [vmem:[#allocation5] sm:$0xff] 0.0
    $region13: #{tpu_custom_call.1} parent=1 // pred_fallthru
      _
    %v40 = vld [vmem:[#allocation2] sm:$0xff]
    %v41 = vld [vmem:[#allocation2 + $0x8] sm:$0xff]
    %v42 = vrsqrt.pop %v40
    %v43 = vmul.f32 %v42, %v40
    %v44 = vmul.f32 %v43, %v42
    %v45 = vmul.f32 0.5, %v44
    %v46 = vsub.f32 1.5, %v45
    %v47 = vmul.f32 %v42, %v46
    %v48 = vmul.f32 %v40, %v47
    %vm49 = vcmp.eq.f32.partialorder %v40, inf
    %v50 = vsel %vm49, %v40, %v48
    %vm51 = vcmp.eq.f32.partialorder %v40, 0.0
    %v52 = vand.u32 %v40, 2147483648
    %v53 = vsel %vm51, %v52, %v50
    %v54 = vrsqrt.pop %v41
    %v55 = vmul.f32 %v54, %v41
    %v56 = vmul.f32 %v55, %v54
    %v57 = vmul.f32 0.5, %v56
    %v58 = vsub.f32 1.5, %v57
    %v59 = vmul.f32 %v54, %v58
    %v60 = vmul.f32 %v41, %v59
    %vm61 = vcmp.eq.f32.partialorder %v41, inf
    %v62 = vsel %vm61, %v41, %v60
    %vm63 = vcmp.eq.f32.partialorder %v41, 0.0
    %v64 = vand.u32 %v41, 2147483648
    %v65 = vsel %vm63, %v64, %v62
    %v66 = vld [vmem:[#allocation5] sm:$0xff]
    %v67 = vadd.f32 %v53, %v65
    %v68 = vadd.f32 %v66, %v67
    %69 = vst [vmem:[#allocation5] sm:$0xff] %v68
    // Predicated region
    $region14: #{tpu_custom_call.1} parent=1 // pred_check
      _
    $region15: #{tpu_custom_call.1} parent=1 // pred_check_branch
      %71 = sbr.rel (0) target = $region17
    $region16: #{tpu_custom_call.1} parent=1 // pred_region
      %73 = vsyncadd [#allocation4], 0
      %s75 = sshll.u32 [#allocation5], 4
      %s76 = int_to_ptr.vmem [resolvable:$true] %s75
      %s77 = sshll.u32 %s1, 4
      %s78 = int_to_ptr.hbm [resolvable:$true] %s77
      %80 = dma.vmem_to_hbm [thread:$0]  %s76, 128, %s78, [#allocation4]
    $region17: #{tpu_custom_call.1} parent=1 // pred_fallthru
      _
    // Predicated region
    $region18: #{tpu_custom_call.1} parent=1 // pred_check
      _
    $region19: #{tpu_custom_call.1} parent=1 // pred_check_branch
      %82 = sbr.rel (0) target = $region21
    $region20: #{tpu_custom_call.1} parent=1 // pred_region
      %84 = dma.done [#allocation4], 128
    $region21: #{tpu_custom_call.1} parent=1 // pred_fallthru
      _
    %85 = vsyncpa [#allocation3], 1
    %86 = vsyncpa [#allocation4], 1

</llo_original>
